<compile_context>
chip_gen: v6e
topology: v6e:2x2x1
jax: 0.10.0
libtpu: 0.0.40
codegen_flags: <defaults>
</compile_context>

<pallas_src>
import jax
import jax.numpy as jnp
import numpy as np
from jax.experimental import pallas as pl
from jax.experimental.pallas import tpu as pltpu

_LANE = 128
# Per-buffer tile target. Pallas double-buffers input and output, so ~4x this
# is resident in VMEM; 2 MiB keeps that at ~8 MiB, safely under v5e's 16 MiB
# default scoped VMEM (and v6e/v7x 32 MiB) while sitting on the measured
# bandwidth plateau (>=1 MiB tiles ~ 85% of HBM roofline).
_TARGET_TILE_BYTES = 2 * 1024 * 1024
# Small ragged inputs are copied as one full-extent block; cap the per-buffer
# size so even a conservatively double-buffered single-step pipeline fits the
# smallest default scoped-VMEM budget.
_RAGGED_FULL_BLOCK_BYTES = 2 * 1024 * 1024


def _identity_kernel(x_ref, o_ref):
    # Straight copy of the current VMEM tile.
    o_ref[...] = x_ref[...]


def _copy_2d(x2d):
    """Stream a (rows, 128) array HBM->VMEM->HBM with large tiles."""
    rows, lane = x2d.shape
    itemsize = jnp.dtype(x2d.dtype).itemsize
    # Dtype-aware packed-sublane multiple: 8 (f32), 16 (bf16), 32 (int8/fp8).
    sub = max(8, 32 // max(itemsize, 1))
    max_rows = max(sub, (_TARGET_TILE_BYTES // (lane * itemsize)) // sub * sub)
    # Full-extent block when the array is small (no (8,128) divisibility
    # constraint applies), otherwise a big sublane-aligned tile; the last
    # partial block is masked automatically by Pallas.
    block_rows = rows if rows <= max_rows else max_rows
    grid = (pl.cdiv(rows, block_rows),)
    return pl.pallas_call(
        _identity_kernel,
        out_shape=jax.ShapeDtypeStruct((rows, lane), x2d.dtype),
        grid_spec=pltpu.PrefetchScalarGridSpec(
            num_scalar_prefetch=0,
            grid=grid,
            in_specs=[pl.BlockSpec((block_rows, lane), lambda i: (i, 0))],
            out_specs=pl.BlockSpec((block_rows, lane), lambda i: (i, 0)),
        ),
        compiler_params=pltpu.CompilerParams(
            dimension_semantics=("parallel",),
        ),
        cost_estimate=pl.CostEstimate(
            flops=0,
            transcendentals=0,
            bytes_accessed=2 * rows * lane * itemsize,
        ),
        # Write the result into the same HBM buffer as the (donated) input:
        # with donation this removes the second HBM allocation entirely.
        input_output_aliases={0: 0},
    )(x2d)


def _copy_ragged(flat2d):
    """Single full-extent block copy for small, non-128-divisible inputs."""
    one, n = flat2d.shape
    itemsize = jnp.dtype(flat2d.dtype).itemsize
    return pl.pallas_call(
        _identity_kernel,
        out_shape=jax.ShapeDtypeStruct((one, n), flat2d.dtype),
        grid_spec=pltpu.PrefetchScalarGridSpec(
            num_scalar_prefetch=0,
            grid=(1,),
            in_specs=[pl.BlockSpec((one, n), lambda i: (0, 0))],
            out_specs=pl.BlockSpec((one, n), lambda i: (0, 0)),
        ),
        cost_estimate=pl.CostEstimate(
            flops=0,
            transcendentals=0,
            bytes_accessed=2 * one * n * itemsize,
        ),
        input_output_aliases={0: 0},
    )(flat2d)


def _identity_impl(x: jax.Array) -> jax.Array:
    """Forward pass of Identity: returns an array equal to x."""
    orig_shape = x.shape
    n = x.size
    if n == 0:
        return x
    itemsize = jnp.dtype(x.dtype).itemsize
    if n % _LANE == 0:
        out = _copy_2d(x.reshape(n // _LANE, _LANE))
        return out.reshape(orig_shape)
    if n * itemsize <= _RAGGED_FULL_BLOCK_BYTES:
        out = _copy_ragged(x.reshape(1, n))
        return out.reshape(orig_shape)
    # Huge inputs whose element count is not a multiple of 128: Identity needs
    # no compute, so returning x directly is exact and costs zero HBM traffic
    # (strictly better than splitting into a main copy + ragged tail).
    # TODO(synk): add a tiled main-chunk + ragged-tail Pallas path if a forced
    # materializing copy is ever required here.
    return x


# Donate the input so the aliased pallas output reuses its HBM buffer
# (zero extra HBM allocation / traffic when the caller no longer needs x).
identity = jax.jit(_identity_impl, donate_argnums=0)

# Non-donating variant for callers that still need x afterwards (XLA inserts a
# defensive copy to preserve the original buffer in that case).
identity_preserving = jax.jit(_identity_impl)


if __name__ == "__main__":
    key = jax.random.PRNGKey(0)
    x = jax.random.normal(key, (2, 4, 16, 16), dtype=jnp.float32)  # NCHW
    x_host = np.asarray(x)  # keep a host copy; x's device buffer is donated
    y = identity(x)
    y = jax.block_until_ready(y)
    assert y.shape == x_host.shape and y.dtype == x_host.dtype
    assert np.array_equal(np.asarray(y), x_host)

    # Exercise the ragged (non-128-divisible) path too, without donation.
    key2 = jax.random.PRNGKey(1)
    z = jax.random.normal(key2, (3, 5, 7), dtype=jnp.float32)
    z_host = np.asarray(z)
    w = jax.block_until_ready(identity_preserving(z))
    assert w.shape == z_host.shape and np.array_equal(np.asarray(w), z_host)

    print("KERNEL_OK")
</pallas_src>

<mosaic_0001>
module attributes {stable_mosaic.version = 11 : i64} {
  func.func @_identity_kernel(%arg0: i32, %arg1: memref<16x128xf32, #tpu.memory_space<vmem>>, %arg2: memref<16x128xf32, #tpu.memory_space<vmem>>) attributes {dimension_semantics = [#tpu.dimension_semantics<parallel>], iteration_bounds = array<i64: 1>, scalar_prefetch = 0 : i64, scratch_operands = 0 : i64, tpu.core_type = #tpu.core_type<tc>, window_params = [{transform_indices = @transform_0, window_bounds = array<i64: 16, 128>}, {transform_indices = @transform_1, window_bounds = array<i64: 16, 128>}]} {
    %c0 = arith.constant 0 : index
    %c0_0 = arith.constant 0 : index
    %0 = vector.load %arg1[%c0, %c0_0] : memref<16x128xf32, #tpu.memory_space<vmem>>, vector<16x128xf32>
    %c0_1 = arith.constant 0 : index
    %c0_2 = arith.constant 0 : index
    %1 = vector.load %arg2[%c0_1, %c0_2] : memref<16x128xf32, #tpu.memory_space<vmem>>, vector<16x128xf32>
    tpu.vector_store %arg2[%c0_1, %c0_2], %0 {strides = array<i32>} : memref<16x128xf32, #tpu.memory_space<vmem>>, vector<16x128xf32>,
    return
  }
  func.func @transform_0(%arg0: i32) -> (i32, i32) {
    %c0_i32 = arith.constant 0 : i32
    %c0_i32_0 = arith.constant 0 : i32
    return %arg0, %c0_i32 : i32, i32
  }
  func.func @transform_1(%arg0: i32) -> (i32, i32) {
    %c0_i32 = arith.constant 0 : i32
    %c0_i32_0 = arith.constant 0 : i32
    return %arg0, %c0_i32 : i32, i32
  }
}

</mosaic_0001>

<llo_original>
// kernel: _identity_impl.1
$region0: #{_identity_impl.1}
  #allocation0 [shape = 'u32[]', space=smem, size = 0x4, offset = 0x4, fixed_abs, tag = 'smem constant byte address 0x4 - core index']
  #allocation1 [shape = 'u32[144,128]{1,0:T(1,128)}', space=vmem, size = 0x12000, scoped, tag = 'internal scratch']
  %s0 = inlined_call_operand.vmem [shape: f32[16,128], index: 0, kind: input, shape index: {}, may-alias: {0,1}]
  %s1 = inlined_call_operand.vmem [shape: f32[16,128], index: 1, kind: output, shape index: {}, may-alias: {0,1}]
  %s2 = sld [smem:[#allocation0]]
  $region14: #{_identity_impl.1} parent=0
    _
  %s4 = ssub.s32 1, %s2
  %s5 = scalar_select 0, %s4, %s2
  // Predicated region
  $region2: #{_identity_impl.1} parent=0 // pred_check
    _
  $region3: #{_identity_impl.1} parent=0 // pred_check_branch
    %7 = sbr.rel (0) target = $region5
  $region4: #{_identity_impl.1} parent=0 // pred_region
    _
  $region5: #{_identity_impl.1} parent=0 // pred_fallthru
    _
  %v8 = vld [vmem:[%s0] sm:$0xff]
  %v9 = vld [vmem:[%s0 + $0x8] sm:$0xff]
  %10 = vst [vmem:[%s1] sm:$0xff] %v8
  %11 = vst [vmem:[%s1 + $0x8] sm:$0xff] %v9
  // Predicated region
  $region6: #{_identity_impl.1} parent=0 // pred_check
    _
  $region7: #{_identity_impl.1} parent=0 // pred_check_branch
    %13 = sbr.rel (0) target = $region9
  $region8: #{_identity_impl.1} parent=0 // pred_region
    _
  $region9: #{_identity_impl.1} parent=0 // pred_fallthru
    _
  // Predicated region
  $region10: #{_identity_impl.1} parent=0 // pred_check
    _
  $region11: #{_identity_impl.1} parent=0 // pred_check_branch
    %15 = sbr.rel (0) target = $region13
  $region12: #{_identity_impl.1} parent=0 // pred_region
    _
  $region13: #{_identity_impl.1} parent=0 // pred_fallthru
    _

</llo_original>
